<compile_context>
chip_gen: v7x
topology: tpu7x:2x2x1
jax: 0.10.0
libtpu: 0.0.40
codegen_flags: <defaults>
</compile_context>

<pallas_src>
import jax
import jax.numpy as jnp
from jax import lax
from jax.experimental import pallas as pl
from jax.experimental.pallas import tpu as pltpu

_SUB = 8      # sublanes per vreg
_LANE = 128   # lanes per vreg
_UNIT = _SUB * _LANE  # 1024 batch elements per dense vreg unit


def _make_mlp_kernel(k_in, hidden, out_dim, block_units, chunk_units):
    """Kernel specialized (fully unrolled) for the tiny feature dims."""
    trips = block_units // chunk_units

    def kernel(w1_ref, b1_ref, w2_ref, b2_ref, x_ref, o_ref):
        # x_ref: (k_in, block_units, 8, 128) VMEM tile, batch fully vreg-dense.
        # w*/b*: flattened f32 arrays in SMEM -> scalar reads, broadcast FMAs
        # on the VPU only (MXU would be pure overhead at K=3/K=4).
        # Hoist every scalar weight/bias read out of the chunk loop (one sld each).
        w1 = [[w1_ref[k * hidden + j] for j in range(hidden)] for k in range(k_in)]
        b1 = [b1_ref[j] for j in range(hidden)]
        w2 = [[w2_ref[j * out_dim + i] for i in range(out_dim)] for j in range(hidden)]
        b2 = [b2_ref[i] for i in range(out_dim)]

        def chunk_body(c, carry):
            off = pl.multiple_of(c * chunk_units, chunk_units)
            sl = pl.ds(off, chunk_units)
            xs = [x_ref[k, sl, :, :] for k in range(k_in)]      # (chunk, 8, 128) each

            # Layer 1: h_j = relu(sum_k x_k * w1[k, j] + b1[j])
            hs = []
            for j in range(hidden):
                acc = xs[0] * w1[0][j]
                for k in range(1, k_in):
                    acc = acc + xs[k] * w1[k][j]
                hs.append(jnp.maximum(acc + b1[j], 0.0))

            # Layer 2: y_i = sum_j h_j * w2[j, i] + b2[i]; dense full-width stores.
            for i in range(out_dim):
                acc = hs[0] * w2[0][i]
                for j in range(1, hidden):
                    acc = acc + hs[j] * w2[j][i]
                o_ref[i, sl, :, :] = (acc + b2[i]).astype(o_ref.dtype)
            return carry

        # Small static trip-count: fully unroll for LLO scheduling visibility.
        lax.fori_loop(0, trips, chunk_body, 0, unroll=True)

    return kernel


def mymodule2_forward(x, w1, b1_vec, w2, b2_vec, *, block_units=64, chunk_units=4):
    """Forward pass of MyModule2.

    x: (N, 3) f32; w1: (3, 4); b1_vec: (4,); w2: (4, 5); b2_vec: (5,).
    Returns (N, 5) f32.
    """
    n, k_in = x.shape
    hidden = w1.shape[1]
    out_dim = w2.shape[1]

    # Pad the batch up to whole (8, 128) units and whole grid blocks.
    units = pl.cdiv(n, _UNIT)
    bu = min(block_units, units)
    units_pad = pl.cdiv(units, bu) * bu
    n_pad = units_pad * _UNIT
    cu = min(chunk_units, bu)
    while bu % cu:  # keep the inner chunk loop evenly dividing the block
        cu -= 1

    # Lane/sublane-dense transposed layout (layout plumbing, not compute):
    # (N, 3) -> (3, N) -> (3, U, 8, 128).
    xT = jnp.transpose(x).astype(jnp.float32)
    if n_pad != n:
        xT = jnp.pad(xT, ((0, 0), (0, n_pad - n)))
    x4 = xT.reshape(k_in, units_pad, _SUB, _LANE)

    grid = (units_pad // bu,)
    smem = pl.BlockSpec(memory_space=pltpu.MemorySpace.SMEM)

    o4 = pl.pallas_call(
        _make_mlp_kernel(k_in, hidden, out_dim, bu, cu),
        out_shape=jax.ShapeDtypeStruct((out_dim, units_pad, _SUB, _LANE), jnp.float32),
        grid=grid,
        in_specs=[
            smem,                                                   # w1 (flattened)
            smem,                                                   # b1
            smem,                                                   # w2 (flattened)
            smem,                                                   # b2
            pl.BlockSpec((k_in, bu, _SUB, _LANE), lambda i: (0, i, 0, 0)),
        ],
        out_specs=pl.BlockSpec((out_dim, bu, _SUB, _LANE), lambda i: (0, i, 0, 0)),
        compiler_params=pltpu.CompilerParams(dimension_semantics=("parallel",)),
    )(
        w1.reshape(-1).astype(jnp.float32),
        b1_vec.astype(jnp.float32),
        w2.reshape(-1).astype(jnp.float32),
        b2_vec.astype(jnp.float32),
        x4,
    )

    # Back to (N, 5): undo reshape / padding / transpose.
    return jnp.transpose(o4.reshape(out_dim, n_pad)[:, :n])


def _ref_forward(x, w1, b1_vec, w2, b2_vec):
    # Pure-JAX reference (elementwise, f32-exact; avoids TPU matmul precision quirks).
    h = jnp.maximum((x[:, :, None] * w1[None, :, :]).sum(axis=1) + b1_vec[None, :], 0.0)
    return (h[:, :, None] * w2[None, :, :]).sum(axis=1) + b2_vec[None, :]


if __name__ == "__main__":
    key = jax.random.PRNGKey(0)

    # Deterministic parameter init matching MyModule2.__init__ shapes.
    w1 = jax.random.normal(key, (3, 4), dtype=jnp.float32)   # torch.randn(3, 4)
    b1 = jnp.zeros((3,), dtype=jnp.float32)                  # torch.zeros(3)
    w2 = jnp.ones((4, 5), dtype=jnp.float32)                 # torch.ones(4, 5)
    b2 = jnp.ones((4,), dtype=jnp.float32)                   # torch.ones(4)

    # Value-preserving broadcast-compatible biases (see TODO(synk) above):
    # bias1 is all-zeros -> zeros(4); bias2 is all-ones -> ones(5).
    b1_vec = jnp.full((4,), b1[0], dtype=jnp.float32)
    b2_vec = jnp.full((5,), b2[0], dtype=jnp.float32)

    # Small input consistent with the forward: last dim must be 3.
    x = jax.random.normal(jax.random.PRNGKey(1), (8, 3), dtype=jnp.float32)
    out = jax.block_until_ready(mymodule2_forward(x, w1, b1_vec, w2, b2_vec))
    ref = _ref_forward(x, w1, b1_vec, w2, b2_vec)
    assert out.shape == (8, 5)
    assert jnp.allclose(out, ref, atol=1e-5, rtol=1e-5)

    # Secondary check exercising the multi-block grid + inner chunk loop paths.
    x2 = jax.random.normal(jax.random.PRNGKey(2), (5000, 3), dtype=jnp.float32)
    out2 = jax.block_until_ready(
        mymodule2_forward(x2, w1, b1_vec, w2, b2_vec, block_units=2, chunk_units=1)
    )
    ref2 = _ref_forward(x2, w1, b1_vec, w2, b2_vec)
    assert out2.shape == (5000, 5)
    assert jnp.allclose(out2, ref2, atol=1e-5, rtol=1e-5)

    print("KERNEL_OK")
</pallas_src>

<mosaic_0001>
module attributes {stable_mosaic.version = 11 : i64} {
  func.func @kernel(%arg0: i32, %arg1: memref<12xf32, #tpu.memory_space<smem>>, %arg2: memref<4xf32, #tpu.memory_space<smem>>, %arg3: memref<20xf32, #tpu.memory_space<smem>>, %arg4: memref<5xf32, #tpu.memory_space<smem>>, %arg5: memref<3x1x8x128xf32, #tpu.memory_space<vmem>>, %arg6: memref<5x1x8x128xf32, #tpu.memory_space<vmem>>) attributes {dimension_semantics = [#tpu.dimension_semantics<parallel>], iteration_bounds = array<i64: 1>, scalar_prefetch = 0 : i64, scratch_operands = 0 : i64, tpu.core_type = #tpu.core_type<tc>, window_params = [{transform_indices = @transform_0, window_bounds = array<i64: 12>}, {transform_indices = @transform_1, window_bounds = array<i64: 4>}, {transform_indices = @transform_2, window_bounds = array<i64: 20>}, {transform_indices = @transform_3, window_bounds = array<i64: 5>}, {transform_indices = @transform_4, window_bounds = array<i64: 3, 1, 8, 128>}, {transform_indices = @transform_5, window_bounds = array<i64: 5, 1, 8, 128>}]} {
    %c0 = arith.constant 0 : index
    %0 = memref.load %arg1[%c0] : memref<12xf32, #tpu.memory_space<smem>>
    %c1 = arith.constant 1 : index
    %1 = memref.load %arg1[%c1] : memref<12xf32, #tpu.memory_space<smem>>
    %c2 = arith.constant 2 : index
    %2 = memref.load %arg1[%c2] : memref<12xf32, #tpu.memory_space<smem>>
    %c3 = arith.constant 3 : index
    %3 = memref.load %arg1[%c3] : memref<12xf32, #tpu.memory_space<smem>>
    %c4 = arith.constant 4 : index
    %4 = memref.load %arg1[%c4] : memref<12xf32, #tpu.memory_space<smem>>
    %c5 = arith.constant 5 : index
    %5 = memref.load %arg1[%c5] : memref<12xf32, #tpu.memory_space<smem>>
    %c6 = arith.constant 6 : index
    %6 = memref.load %arg1[%c6] : memref<12xf32, #tpu.memory_space<smem>>
    %c7 = arith.constant 7 : index
    %7 = memref.load %arg1[%c7] : memref<12xf32, #tpu.memory_space<smem>>
    %c8 = arith.constant 8 : index
    %8 = memref.load %arg1[%c8] : memref<12xf32, #tpu.memory_space<smem>>
    %c9 = arith.constant 9 : index
    %9 = memref.load %arg1[%c9] : memref<12xf32, #tpu.memory_space<smem>>
    %c10 = arith.constant 10 : index
    %10 = memref.load %arg1[%c10] : memref<12xf32, #tpu.memory_space<smem>>
    %c11 = arith.constant 11 : index
    %11 = memref.load %arg1[%c11] : memref<12xf32, #tpu.memory_space<smem>>
    %c0_0 = arith.constant 0 : index
    %12 = memref.load %arg2[%c0_0] : memref<4xf32, #tpu.memory_space<smem>>
    %c1_1 = arith.constant 1 : index
    %13 = memref.load %arg2[%c1_1] : memref<4xf32, #tpu.memory_space<smem>>
    %c2_2 = arith.constant 2 : index
    %14 = memref.load %arg2[%c2_2] : memref<4xf32, #tpu.memory_space<smem>>
    %c3_3 = arith.constant 3 : index
    %15 = memref.load %arg2[%c3_3] : memref<4xf32, #tpu.memory_space<smem>>
    %c0_4 = arith.constant 0 : index
    %16 = memref.load %arg3[%c0_4] : memref<20xf32, #tpu.memory_space<smem>>
    %c1_5 = arith.constant 1 : index
    %17 = memref.load %arg3[%c1_5] : memref<20xf32, #tpu.memory_space<smem>>
    %c2_6 = arith.constant 2 : index
    %18 = memref.load %arg3[%c2_6] : memref<20xf32, #tpu.memory_space<smem>>
    %c3_7 = arith.constant 3 : index
    %19 = memref.load %arg3[%c3_7] : memref<20xf32, #tpu.memory_space<smem>>
    %c4_8 = arith.constant 4 : index
    %20 = memref.load %arg3[%c4_8] : memref<20xf32, #tpu.memory_space<smem>>
    %c5_9 = arith.constant 5 : index
    %21 = memref.load %arg3[%c5_9] : memref<20xf32, #tpu.memory_space<smem>>
    %c6_10 = arith.constant 6 : index
    %22 = memref.load %arg3[%c6_10] : memref<20xf32, #tpu.memory_space<smem>>
    %c7_11 = arith.constant 7 : index
    %23 = memref.load %arg3[%c7_11] : memref<20xf32, #tpu.memory_space<smem>>
    %c8_12 = arith.constant 8 : index
    %24 = memref.load %arg3[%c8_12] : memref<20xf32, #tpu.memory_space<smem>>
    %c9_13 = arith.constant 9 : index
    %25 = memref.load %arg3[%c9_13] : memref<20xf32, #tpu.memory_space<smem>>
    %c10_14 = arith.constant 10 : index
    %26 = memref.load %arg3[%c10_14] : memref<20xf32, #tpu.memory_space<smem>>
    %c11_15 = arith.constant 11 : index
    %27 = memref.load %arg3[%c11_15] : memref<20xf32, #tpu.memory_space<smem>>
    %c12 = arith.constant 12 : index
    %28 = memref.load %arg3[%c12] : memref<20xf32, #tpu.memory_space<smem>>
    %c13 = arith.constant 13 : index
    %29 = memref.load %arg3[%c13] : memref<20xf32, #tpu.memory_space<smem>>
    %c14 = arith.constant 14 : index
    %30 = memref.load %arg3[%c14] : memref<20xf32, #tpu.memory_space<smem>>
    %c15 = arith.constant 15 : index
    %31 = memref.load %arg3[%c15] : memref<20xf32, #tpu.memory_space<smem>>
    %c16 = arith.constant 16 : index
    %32 = memref.load %arg3[%c16] : memref<20xf32, #tpu.memory_space<smem>>
    %c17 = arith.constant 17 : index
    %33 = memref.load %arg3[%c17] : memref<20xf32, #tpu.memory_space<smem>>
    %c18 = arith.constant 18 : index
    %34 = memref.load %arg3[%c18] : memref<20xf32, #tpu.memory_space<smem>>
    %c19 = arith.constant 19 : index
    %35 = memref.load %arg3[%c19] : memref<20xf32, #tpu.memory_space<smem>>
    %c0_16 = arith.constant 0 : index
    %36 = memref.load %arg4[%c0_16] : memref<5xf32, #tpu.memory_space<smem>>
    %c1_17 = arith.constant 1 : index
    %37 = memref.load %arg4[%c1_17] : memref<5xf32, #tpu.memory_space<smem>>
    %c2_18 = arith.constant 2 : index
    %38 = memref.load %arg4[%c2_18] : memref<5xf32, #tpu.memory_space<smem>>
    %c3_19 = arith.constant 3 : index
    %39 = memref.load %arg4[%c3_19] : memref<5xf32, #tpu.memory_space<smem>>
    %c4_20 = arith.constant 4 : index
    %40 = memref.load %arg4[%c4_20] : memref<5xf32, #tpu.memory_space<smem>>
    %c0_i32 = arith.constant 0 : i32
    %c1_i32 = arith.constant 1 : i32
    %41 = arith.muli %c0_i32, %c1_i32 : i32
    %42 = tpu.assume_multiple %41, 1 : i32
    %c0_21 = arith.constant 0 : index
    %43 = arith.index_cast %42 : i32 to index
    %c0_22 = arith.constant 0 : index
    %c0_23 = arith.constant 0 : index
    %44 = vector.load %arg5[%c0_21, %43, %c0_22, %c0_23] : memref<3x1x8x128xf32, #tpu.memory_space<vmem>>, vector<1x1x8x128xf32>
    %45 = vector.shape_cast %44 : vector<1x1x8x128xf32> to vector<1x8x128xf32>
    %c1_24 = arith.constant 1 : index
    %46 = arith.index_cast %42 : i32 to index
    %c0_25 = arith.constant 0 : index
    %c0_26 = arith.constant 0 : index
    %47 = vector.load %arg5[%c1_24, %46, %c0_25, %c0_26] : memref<3x1x8x128xf32, #tpu.memory_space<vmem>>, vector<1x1x8x128xf32>
    %48 = vector.shape_cast %47 : vector<1x1x8x128xf32> to vector<1x8x128xf32>
    %c2_27 = arith.constant 2 : index
    %49 = arith.index_cast %42 : i32 to index
    %c0_28 = arith.constant 0 : index
    %c0_29 = arith.constant 0 : index
    %50 = vector.load %arg5[%c2_27, %49, %c0_28, %c0_29] : memref<3x1x8x128xf32, #tpu.memory_space<vmem>>, vector<1x1x8x128xf32>
    %51 = vector.shape_cast %50 : vector<1x1x8x128xf32> to vector<1x8x128xf32>
    %52 = vector.broadcast %0 : f32 to vector<1x8x128xf32>
    %53 = arith.mulf %45, %52 : vector<1x8x128xf32>
    %54 = vector.broadcast %4 : f32 to vector<1x8x128xf32>
    %55 = arith.mulf %48, %54 : vector<1x8x128xf32>
    %56 = arith.addf %53, %55 : vector<1x8x128xf32>
    %57 = vector.broadcast %8 : f32 to vector<1x8x128xf32>
    %58 = arith.mulf %51, %57 : vector<1x8x128xf32>
    %59 = arith.addf %56, %58 : vector<1x8x128xf32>
    %60 = vector.broadcast %12 : f32 to vector<1x8x128xf32>
    %61 = arith.addf %59, %60 : vector<1x8x128xf32>
    %cst = arith.constant 0.000000e+00 : f32
    %62 = vector.broadcast %cst : f32 to vector<1x8x128xf32>
    %63 = arith.maximumf %61, %62 : vector<1x8x128xf32>
    %64 = vector.broadcast %1 : f32 to vector<1x8x128xf32>
    %65 = arith.mulf %45, %64 : vector<1x8x128xf32>
    %66 = vector.broadcast %5 : f32 to vector<1x8x128xf32>
    %67 = arith.mulf %48, %66 : vector<1x8x128xf32>
    %68 = arith.addf %65, %67 : vector<1x8x128xf32>
    %69 = vector.broadcast %9 : f32 to vector<1x8x128xf32>
    %70 = arith.mulf %51, %69 : vector<1x8x128xf32>
    %71 = arith.addf %68, %70 : vector<1x8x128xf32>
    %72 = vector.broadcast %13 : f32 to vector<1x8x128xf32>
    %73 = arith.addf %71, %72 : vector<1x8x128xf32>
    %cst_30 = arith.constant 0.000000e+00 : f32
    %74 = vector.broadcast %cst_30 : f32 to vector<1x8x128xf32>
    %75 = arith.maximumf %73, %74 : vector<1x8x128xf32>
    %76 = vector.broadcast %2 : f32 to vector<1x8x128xf32>
    %77 = arith.mulf %45, %76 : vector<1x8x128xf32>
    %78 = vector.broadcast %6 : f32 to vector<1x8x128xf32>
    %79 = arith.mulf %48, %78 : vector<1x8x128xf32>
    %80 = arith.addf %77, %79 : vector<1x8x128xf32>
    %81 = vector.broadcast %10 : f32 to vector<1x8x128xf32>
    %82 = arith.mulf %51, %81 : vector<1x8x128xf32>
    %83 = arith.addf %80, %82 : vector<1x8x128xf32>
    %84 = vector.broadcast %14 : f32 to vector<1x8x128xf32>
    %85 = arith.addf %83, %84 : vector<1x8x128xf32>
    %cst_31 = arith.constant 0.000000e+00 : f32
    %86 = vector.broadcast %cst_31 : f32 to vector<1x8x128xf32>
    %87 = arith.maximumf %85, %86 : vector<1x8x128xf32>
    %88 = vector.broadcast %3 : f32 to vector<1x8x128xf32>
    %89 = arith.mulf %45, %88 : vector<1x8x128xf32>
    %90 = vector.broadcast %7 : f32 to vector<1x8x128xf32>
    %91 = arith.mulf %48, %90 : vector<1x8x128xf32>
    %92 = arith.addf %89, %91 : vector<1x8x128xf32>
    %93 = vector.broadcast %11 : f32 to vector<1x8x128xf32>
    %94 = arith.mulf %51, %93 : vector<1x8x128xf32>
    %95 = arith.addf %92, %94 : vector<1x8x128xf32>
    %96 = vector.broadcast %15 : f32 to vector<1x8x128xf32>
    %97 = arith.addf %95, %96 : vector<1x8x128xf32>
    %cst_32 = arith.constant 0.000000e+00 : f32
    %98 = vector.broadcast %cst_32 : f32 to vector<1x8x128xf32>
    %99 = arith.maximumf %97, %98 : vector<1x8x128xf32>
    %100 = vector.broadcast %16 : f32 to vector<1x8x128xf32>
    %101 = arith.mulf %63, %100 : vector<1x8x128xf32>
    %102 = vector.broadcast %21 : f32 to vector<1x8x128xf32>
    %103 = arith.mulf %75, %102 : vector<1x8x128xf32>
    %104 = arith.addf %101, %103 : vector<1x8x128xf32>
    %105 = vector.broadcast %26 : f32 to vector<1x8x128xf32>
    %106 = arith.mulf %87, %105 : vector<1x8x128xf32>
    %107 = arith.addf %104, %106 : vector<1x8x128xf32>
    %108 = vector.broadcast %31 : f32 to vector<1x8x128xf32>
    %109 = arith.mulf %99, %108 : vector<1x8x128xf32>
    %110 = arith.addf %107, %109 : vector<1x8x128xf32>
    %111 = vector.broadcast %36 : f32 to vector<1x8x128xf32>
    %112 = arith.addf %110, %111 : vector<1x8x128xf32>
    %c0_33 = arith.constant 0 : index
    %113 = arith.index_cast %42 : i32 to index
    %c0_34 = arith.constant 0 : index
    %c0_35 = arith.constant 0 : index
    %114 = vector.load %arg6[%c0_33, %113, %c0_34, %c0_35] : memref<5x1x8x128xf32, #tpu.memory_space<vmem>>, vector<1x1x8x128xf32>
    %115 = vector.shape_cast %114 : vector<1x1x8x128xf32> to vector<1x8x128xf32>
    %116 = vector.shape_cast %112 : vector<1x8x128xf32> to vector<1x1x8x128xf32>
    tpu.vector_store %arg6[%c0_33, %113, %c0_34, %c0_35], %116 {strides = array<i32>} : memref<5x1x8x128xf32, #tpu.memory_space<vmem>>, vector<1x1x8x128xf32>,
    %117 = vector.broadcast %17 : f32 to vector<1x8x128xf32>
    %118 = arith.mulf %63, %117 : vector<1x8x128xf32>
    %119 = vector.broadcast %22 : f32 to vector<1x8x128xf32>
    %120 = arith.mulf %75, %119 : vector<1x8x128xf32>
    %121 = arith.addf %118, %120 : vector<1x8x128xf32>
    %122 = vector.broadcast %27 : f32 to vector<1x8x128xf32>
    %123 = arith.mulf %87, %122 : vector<1x8x128xf32>
    %124 = arith.addf %121, %123 : vector<1x8x128xf32>
    %125 = vector.broadcast %32 : f32 to vector<1x8x128xf32>
    %126 = arith.mulf %99, %125 : vector<1x8x128xf32>
    %127 = arith.addf %124, %126 : vector<1x8x128xf32>
    %128 = vector.broadcast %37 : f32 to vector<1x8x128xf32>
    %129 = arith.addf %127, %128 : vector<1x8x128xf32>
    %c1_36 = arith.constant 1 : index
    %130 = arith.index_cast %42 : i32 to index
    %c0_37 = arith.constant 0 : index
    %c0_38 = arith.constant 0 : index
    %131 = vector.load %arg6[%c1_36, %130, %c0_37, %c0_38] : memref<5x1x8x128xf32, #tpu.memory_space<vmem>>, vector<1x1x8x128xf32>
    %132 = vector.shape_cast %131 : vector<1x1x8x128xf32> to vector<1x8x128xf32>
    %133 = vector.shape_cast %129 : vector<1x8x128xf32> to vector<1x1x8x128xf32>
    tpu.vector_store %arg6[%c1_36, %130, %c0_37, %c0_38], %133 {strides = array<i32>} : memref<5x1x8x128xf32, #tpu.memory_space<vmem>>, vector<1x1x8x128xf32>,
    %134 = vector.broadcast %18 : f32 to vector<1x8x128xf32>
    %135 = arith.mulf %63, %134 : vector<1x8x128xf32>
    %136 = vector.broadcast %23 : f32 to vector<1x8x128xf32>
    %137 = arith.mulf %75, %136 : vector<1x8x128xf32>
    %138 = arith.addf %135, %137 : vector<1x8x128xf32>
    %139 = vector.broadcast %28 : f32 to vector<1x8x128xf32>
    %140 = arith.mulf %87, %139 : vector<1x8x128xf32>
    %141 = arith.addf %138, %140 : vector<1x8x128xf32>
    %142 = vector.broadcast %33 : f32 to vector<1x8x128xf32>
    %143 = arith.mulf %99, %142 : vector<1x8x128xf32>
    %144 = arith.addf %141, %143 : vector<1x8x128xf32>
    %145 = vector.broadcast %38 : f32 to vector<1x8x128xf32>
    %146 = arith.addf %144, %145 : vector<1x8x128xf32>
    %c2_39 = arith.constant 2 : index
    %147 = arith.index_cast %42 : i32 to index
    %c0_40 = arith.constant 0 : index
    %c0_41 = arith.constant 0 : index
    %148 = vector.load %arg6[%c2_39, %147, %c0_40, %c0_41] : memref<5x1x8x128xf32, #tpu.memory_space<vmem>>, vector<1x1x8x128xf32>
    %149 = vector.shape_cast %148 : vector<1x1x8x128xf32> to vector<1x8x128xf32>
    %150 = vector.shape_cast %146 : vector<1x8x128xf32> to vector<1x1x8x128xf32>
    tpu.vector_store %arg6[%c2_39, %147, %c0_40, %c0_41], %150 {strides = array<i32>} : memref<5x1x8x128xf32, #tpu.memory_space<vmem>>, vector<1x1x8x128xf32>,
    %151 = vector.broadcast %19 : f32 to vector<1x8x128xf32>
    %152 = arith.mulf %63, %151 : vector<1x8x128xf32>
    %153 = vector.broadcast %24 : f32 to vector<1x8x128xf32>
    %154 = arith.mulf %75, %153 : vector<1x8x128xf32>
    %155 = arith.addf %152, %154 : vector<1x8x128xf32>
    %156 = vector.broadcast %29 : f32 to vector<1x8x128xf32>
    %157 = arith.mulf %87, %156 : vector<1x8x128xf32>
    %158 = arith.addf %155, %157 : vector<1x8x128xf32>
    %159 = vector.broadcast %34 : f32 to vector<1x8x128xf32>
    %160 = arith.mulf %99, %159 : vector<1x8x128xf32>
    %161 = arith.addf %158, %160 : vector<1x8x128xf32>
    %162 = vector.broadcast %39 : f32 to vector<1x8x128xf32>
    %163 = arith.addf %161, %162 : vector<1x8x128xf32>
    %c3_42 = arith.constant 3 : index
    %164 = arith.index_cast %42 : i32 to index
    %c0_43 = arith.constant 0 : index
    %c0_44 = arith.constant 0 : index
    %165 = vector.load %arg6[%c3_42, %164, %c0_43, %c0_44] : memref<5x1x8x128xf32, #tpu.memory_space<vmem>>, vector<1x1x8x128xf32>
    %166 = vector.shape_cast %165 : vector<1x1x8x128xf32> to vector<1x8x128xf32>
    %167 = vector.shape_cast %163 : vector<1x8x128xf32> to vector<1x1x8x128xf32>
    tpu.vector_store %arg6[%c3_42, %164, %c0_43, %c0_44], %167 {strides = array<i32>} : memref<5x1x8x128xf32, #tpu.memory_space<vmem>>, vector<1x1x8x128xf32>,
    %168 = vector.broadcast %20 : f32 to vector<1x8x128xf32>
    %169 = arith.mulf %63, %168 : vector<1x8x128xf32>
    %170 = vector.broadcast %25 : f32 to vector<1x8x128xf32>
    %171 = arith.mulf %75, %170 : vector<1x8x128xf32>
    %172 = arith.addf %169, %171 : vector<1x8x128xf32>
    %173 = vector.broadcast %30 : f32 to vector<1x8x128xf32>
    %174 = arith.mulf %87, %173 : vector<1x8x128xf32>
    %175 = arith.addf %172, %174 : vector<1x8x128xf32>
    %176 = vector.broadcast %35 : f32 to vector<1x8x128xf32>
    %177 = arith.mulf %99, %176 : vector<1x8x128xf32>
    %178 = arith.addf %175, %177 : vector<1x8x128xf32>
    %179 = vector.broadcast %40 : f32 to vector<1x8x128xf32>
    %180 = arith.addf %178, %179 : vector<1x8x128xf32>
    %c4_45 = arith.constant 4 : index
    %181 = arith.index_cast %42 : i32 to index
    %c0_46 = arith.constant 0 : index
    %c0_47 = arith.constant 0 : index
    %182 = vector.load %arg6[%c4_45, %181, %c0_46, %c0_47] : memref<5x1x8x128xf32, #tpu.memory_space<vmem>>, vector<1x1x8x128xf32>
    %183 = vector.shape_cast %182 : vector<1x1x8x128xf32> to vector<1x8x128xf32>
    %184 = vector.shape_cast %180 : vector<1x8x128xf32> to vector<1x1x8x128xf32>
    tpu.vector_store %arg6[%c4_45, %181, %c0_46, %c0_47], %184 {strides = array<i32>} : memref<5x1x8x128xf32, #tpu.memory_space<vmem>>, vector<1x1x8x128xf32>,
    %c1_i32_48 = arith.constant 1 : i32
    return
  }
  func.func @transform_0(%arg0: i32) -> i32 {
    %c0_i32 = arith.constant 0 : i32
    %c0_i32_0 = arith.constant 0 : i32
    return %c0_i32 : i32
  }
  func.func @transform_1(%arg0: i32) -> i32 {
    %c0_i32 = arith.constant 0 : i32
    %c0_i32_0 = arith.constant 0 : i32
    return %c0_i32 : i32
  }
  func.func @transform_2(%arg0: i32) -> i32 {
    %c0_i32 = arith.constant 0 : i32
    %c0_i32_0 = arith.constant 0 : i32
    return %c0_i32 : i32
  }
  func.func @transform_3(%arg0: i32) -> i32 {
    %c0_i32 = arith.constant 0 : i32
    %c0_i32_0 = arith.constant 0 : i32
    return %c0_i32 : i32
  }
  func.func @transform_4(%arg0: i32) -> (i32, i32, i32, i32) {
    %c0_i32 = arith.constant 0 : i32
    %c0_i32_0 = arith.constant 0 : i32
    %c0_i32_1 = arith.constant 0 : i32
    %c0_i32_2 = arith.constant 0 : i32
    return %c0_i32, %arg0, %c0_i32_0, %c0_i32_1 : i32, i32, i32, i32
  }
  func.func @transform_5(%arg0: i32) -> (i32, i32, i32, i32) {
    %c0_i32 = arith.constant 0 : i32
    %c0_i32_0 = arith.constant 0 : i32
    %c0_i32_1 = arith.constant 0 : i32
    %c0_i32_2 = arith.constant 0 : i32
    return %c0_i32, %arg0, %c0_i32_0, %c0_i32_1 : i32, i32, i32, i32
  }
}

</mosaic_0001>

<llo_original>
// kernel: tpu_custom_call.1
$region0: #{tpu_custom_call.1}
  #allocation0 [shape = 'u32[]', space=smem, size = 0x4, offset = 0x4, fixed_abs, tag = 'smem constant byte address 0x4 - core index']
  #allocation1 [shape = 'u32[144,128]{1,0:T(1,128)}', space=vmem, size = 0x12000, scoped, tag = 'internal scratch']
  %s0 = inlined_call_operand.hbm [shape: f32[12], index: 0, kind: input, shape index: {}]
  %s1 = inlined_call_operand.vmem [shape: f32[4], index: 1, kind: input, shape index: {}]
  %s2 = inlined_call_operand.vmem [shape: f32[20], index: 2, kind: input, shape index: {}]
  %s3 = inlined_call_operand.vmem [shape: f32[5], index: 3, kind: input, shape index: {}]
  %s4 = inlined_call_operand.hbm [shape: f32[3,1,8,128], index: 4, kind: input, shape index: {}]
  %s5 = inlined_call_operand.hbm [shape: f32[5,1,8,128], index: 5, kind: output, shape index: {}]
  %s6 = sld [smem:[#allocation0]]
  $region50: #{tpu_custom_call.1} parent=0
    _
  %s8 = ssub.s32 1, %s6
  %s9 = scalar_select 0, %s8, %s6
  $region1: #{tpu_custom_call.1} parent=0
    #allocation2 [shape = 'u8[512]{0}', space=smem, size = 0x200, scoped, tag = 'input window, operand 0, single buffered']
    #allocation3 [shape = 's32[1]{0}', space=sflag, size = 0x4, scoped, tag = 'scoped memory for tpu_custom_call.1']
    #allocation4 [shape = 's32[1]{0}', space=sflag, size = 0x4, scoped, tag = 'scoped memory for tpu_custom_call.1']
    #allocation5 [shape = 's32[1]{0}', space=sflag, size = 0x4, scoped, tag = 'scoped memory for tpu_custom_call.1']
    #allocation6 [shape = 's32[1]{0}', space=sflag, size = 0x4, scoped, tag = 'scoped memory for tpu_custom_call.1']
    #allocation7 [shape = 'u8[512]{0}', space=smem, size = 0x200, scoped, tag = 'input window, operand 1, single buffered']
    #allocation8 [shape = 'u8[512]{0}', space=smem, size = 0x200, scoped, tag = 'input window, operand 2, single buffered']
    #allocation9 [shape = 's32[1]{0}', space=sflag, size = 0x4, scoped, tag = 'scoped memory for tpu_custom_call.1']
    #allocation10 [shape = 'u8[512]{0}', space=smem, size = 0x200, scoped, tag = 'input window, operand 3, single buffered']
    #allocation11 [shape = 'u8[12288]{0}', space=vmem, size = 0x3000, scoped, tag = 'input window, operand 4, single buffered']
    #allocation12 [shape = 'u8[20480]{0}', space=vmem, size = 0x5000, scoped, tag = 'output window, operand 0, single buffered']
    %10 = vsyncpa [#allocation5], 0
    %11 = vsyncpa [#allocation6], 0
    %12 = vsyncpa [#allocation9], 0
    %13 = vsyncpa [#allocation3], 0
    %14 = vsyncpa [#allocation4], 0
    // Predicated region
    $region2: #{tpu_custom_call.1} parent=1 // pred_check
      _
    $region3: #{tpu_custom_call.1} parent=1 // pred_check_branch
      %16 = sbr.rel (0) target = $region5
    $region4: #{tpu_custom_call.1} parent=1 // pred_region
      %s18 = ssub.s32 16, 16
      %19 = vsyncadd [#allocation5], %s18
      %22 = dma.hbm_to_smem %s0, 16, [#allocation2], [#allocation5]
    $region5: #{tpu_custom_call.1} parent=1 // pred_fallthru
      _
    // Predicated region
    $region6: #{tpu_custom_call.1} parent=1 // pred_check
      _
    $region7: #{tpu_custom_call.1} parent=1 // pred_check_branch
      %24 = sbr.rel (0) target = $region9
    $region8: #{tpu_custom_call.1} parent=1 // pred_region
      %s26 = ssub.s32 16, 16
      %27 = vsyncadd [#allocation6], %s26
      %s29 = sshll.u32 %s1, 4
      %s30 = int_to_ptr.vmem [resolvable:$true] %s29
      %32 = dma.vmem_to_smem %s30, 16, [#allocation7], [#allocation6]
    $region9: #{tpu_custom_call.1} parent=1 // pred_fallthru
      _
    // Predicated region
    $region10: #{tpu_custom_call.1} parent=1 // pred_check
      _
    $region11: #{tpu_custom_call.1} parent=1 // pred_check_branch
      %34 = sbr.rel (0) target = $region13
    $region12: #{tpu_custom_call.1} parent=1 // pred_region
      %s36 = ssub.s32 16, 16
      %37 = vsyncadd [#allocation9], %s36
      %s39 = sshll.u32 %s2, 4
      %s40 = int_to_ptr.vmem [resolvable:$true] %s39
      %42 = dma.vmem_to_smem %s40, 16, [#allocation8], [#allocation9]
    $region13: #{tpu_custom_call.1} parent=1 // pred_fallthru
      _
    // Predicated region
    $region14: #{tpu_custom_call.1} parent=1 // pred_check
      _
    $region15: #{tpu_custom_call.1} parent=1 // pred_check_branch
      %44 = sbr.rel (0) target = $region17
    $region16: #{tpu_custom_call.1} parent=1 // pred_region
      %s46 = ssub.s32 16, 16
      %47 = vsyncadd [#allocation9], %s46
      %s49 = sshll.u32 %s3, 4
      %s50 = int_to_ptr.vmem [resolvable:$true] %s49
      %52 = dma.vmem_to_smem %s50, 16, [#allocation10], [#allocation9]
    $region17: #{tpu_custom_call.1} parent=1 // pred_fallthru
      _
    // Predicated region
    $region18: #{tpu_custom_call.1} parent=1 // pred_check
      _
    $region19: #{tpu_custom_call.1} parent=1 // pred_check_branch
      %54 = sbr.rel (0) target = $region21
    $region20: #{tpu_custom_call.1} parent=1 // pred_region
      %s56 = ssub.s32 384, 384
      %57 = vsyncadd [#allocation3], %s56
      %s58 = sshll.u32 [#allocation11], 4
      %s59 = int_to_ptr.vmem [resolvable:$true] %s58
      %64 = dma.hbm_to_vmem [thread:$0]  %s4, 384, %s59, [#allocation3], 128, 128, 8
    $region21: #{tpu_custom_call.1} parent=1 // pred_fallthru
      _
    // Predicated region
    $region22: #{tpu_custom_call.1} parent=1 // pred_check
      _
    $region23: #{tpu_custom_call.1} parent=1 // pred_check_branch
      %66 = sbr.rel (0) target = $region25
    $region24: #{tpu_custom_call.1} parent=1 // pred_region
      %67 = dma.done [#allocation5], 16
    $region25: #{tpu_custom_call.1} parent=1 // pred_fallthru
      _
    // Predicated region
    $region26: #{tpu_custom_call.1} parent=1 // pred_check
      _
    $region27: #{tpu_custom_call.1} parent=1 // pred_check_branch
      %69 = sbr.rel (0) target = $region29
    $region28: #{tpu_custom_call.1} parent=1 // pred_region
      %70 = dma.done [#allocation6], 16
    $region29: #{tpu_custom_call.1} parent=1 // pred_fallthru
      _
    // Predicated region
    $region30: #{tpu_custom_call.1} parent=1 // pred_check
      _
    $region31: #{tpu_custom_call.1} parent=1 // pred_check_branch
      %72 = sbr.rel (0) target = $region33
    $region32: #{tpu_custom_call.1} parent=1 // pred_region
      %73 = dma.done [#allocation9], 16
    $region33: #{tpu_custom_call.1} parent=1 // pred_fallthru
      _
    // Predicated region
    $region34: #{tpu_custom_call.1} parent=1 // pred_check
      _
    $region35: #{tpu_custom_call.1} parent=1 // pred_check_branch
      %75 = sbr.rel (0) target = $region37
    $region36: #{tpu_custom_call.1} parent=1 // pred_region
      %76 = dma.done [#allocation9], 16
    $region37: #{tpu_custom_call.1} parent=1 // pred_fallthru
      _
    // Predicated region
    $region38: #{tpu_custom_call.1} parent=1 // pred_check
      _
    $region39: #{tpu_custom_call.1} parent=1 // pred_check_branch
      %78 = sbr.rel (0) target = $region41
    $region40: #{tpu_custom_call.1} parent=1 // pred_region
      %79 = dma.done [#allocation3], 384
    $region41: #{tpu_custom_call.1} parent=1 // pred_fallthru
      _
    %80 = sfence
    %s81 = sld [smem:[#allocation2]]
    %s82 = sld [smem:[#allocation2 + $0x1]]
    %s83 = sld [smem:[#allocation2 + $0x2]]
    %s84 = sld [smem:[#allocation2 + $0x3]]
    %s85 = sld [smem:[#allocation2 + $0x4]]
    %s86 = sld [smem:[#allocation2 + $0x5]]
    %s87 = sld [smem:[#allocation2 + $0x6]]
    %s88 = sld [smem:[#allocation2 + $0x7]]
    %s89 = sld [smem:[#allocation2 + $0x8]]
    %s90 = sld [smem:[#allocation2 + $0x9]]
    %s91 = sld [smem:[#allocation2 + $0xa]]
    %s92 = sld [smem:[#allocation2 + $0xb]]
    %s93 = sld [smem:[#allocation7]]
    %s94 = sld [smem:[#allocation7 + $0x1]]
    %s95 = sld [smem:[#allocation7 + $0x2]]
    %s96 = sld [smem:[#allocation7 + $0x3]]
    %s97 = sld [smem:[#allocation8]]
    %s98 = sld [smem:[#allocation8 + $0x1]]
    %s99 = sld [smem:[#allocation8 + $0x2]]
    %s100 = sld [smem:[#allocation8 + $0x3]]
    %s101 = sld [smem:[#allocation8 + $0x4]]
    %s102 = sld [smem:[#allocation8 + $0x5]]
    %s103 = sld [smem:[#allocation8 + $0x6]]
    %s104 = sld [smem:[#allocation8 + $0x7]]
    %s105 = sld [smem:[#allocation8 + $0x8]]
    %s106 = sld [smem:[#allocation8 + $0x9]]
    %s107 = sld [smem:[#allocation8 + $0xa]]
    %s108 = sld [smem:[#allocation8 + $0xb]]
    %s109 = sld [smem:[#allocation8 + $0xc]]
    %s110 = sld [smem:[#allocation8 + $0xd]]
    %s111 = sld [smem:[#allocation8 + $0xe]]
    %s112 = sld [smem:[#allocation8 + $0xf]]
    %s113 = sld [smem:[#allocation8 + $0x10]]
    %s114 = sld [smem:[#allocation8 + $0x11]]
    %s115 = sld [smem:[#allocation8 + $0x12]]
    %s116 = sld [smem:[#allocation8 + $0x13]]
    %s117 = sld [smem:[#allocation10]]
    %s118 = sld [smem:[#allocation10 + $0x1]]
    %s119 = sld [smem:[#allocation10 + $0x2]]
    %s120 = sld [smem:[#allocation10 + $0x3]]
    %s121 = sld [smem:[#allocation10 + $0x4]]
    %s122 = smul.u32 0, 8
    %s123 = scalar_lea.vmem [#allocation11], %s122
    %v124 = vld [vmem:[%s123] sm:$0xff]
    %s125 = sadd.s32 %s122, 8
    %s126 = scalar_lea.vmem [#allocation11], %s125
    %v127 = vld [vmem:[%s126] sm:$0xff]
    %s128 = sadd.s32 %s122, 16
    %s129 = scalar_lea.vmem [#allocation11], %s128
    %v130 = vld [vmem:[%s129] sm:$0xff]
    %v131 = vstv %s81
    %v132 = vmul.f32 %v124, %v131
    %v133 = vstv %s85
    %v134 = vmul.f32 %v127, %v133
    %v135 = vadd.f32 %v132, %v134
    %v136 = vstv %s89
    %v137 = vmul.f32 %v130, %v136
    %v138 = vadd.f32 %v135, %v137
    %v139 = vstv %s93
    %v140 = vadd.f32 %v138, %v139
    %v141 = vmax.f32 %v140, 0.0
    %v142 = vstv %s82
    %v143 = vmul.f32 %v124, %v142
    %v144 = vstv %s86
    %v145 = vmul.f32 %v127, %v144
    %v146 = vadd.f32 %v143, %v145
    %v147 = vstv %s90
    %v148 = vmul.f32 %v130, %v147
    %v149 = vadd.f32 %v146, %v148
    %v150 = vstv %s94
    %v151 = vadd.f32 %v149, %v150
    %v152 = vmax.f32 %v151, 0.0
    %v153 = vstv %s83
    %v154 = vmul.f32 %v124, %v153
    %v155 = vstv %s87
    %v156 = vmul.f32 %v127, %v155
    %v157 = vadd.f32 %v154, %v156
    %v158 = vstv %s91
    %v159 = vmul.f32 %v130, %v158
    %v160 = vadd.f32 %v157, %v159
    %v161 = vstv %s95
    %v162 = vadd.f32 %v160, %v161
    %v163 = vmax.f32 %v162, 0.0
    %v164 = vstv %s84
    %v165 = vmul.f32 %v124, %v164
    %v166 = vstv %s88
    %v167 = vmul.f32 %v127, %v166
    %v168 = vadd.f32 %v165, %v167
    %v169 = vstv %s92
    %v170 = vmul.f32 %v130, %v169
    %v171 = vadd.f32 %v168, %v170
    %v172 = vstv %s96
    %v173 = vadd.f32 %v171, %v172
    %v174 = vmax.f32 %v173, 0.0
    %v175 = vstv %s97
    %v176 = vmul.f32 %v141, %v175
    %v177 = vstv %s102
    %v178 = vmul.f32 %v152, %v177
    %v179 = vadd.f32 %v176, %v178
    %v180 = vstv %s107
    %v181 = vmul.f32 %v163, %v180
    %v182 = vadd.f32 %v179, %v181
    %v183 = vstv %s112
    %v184 = vmul.f32 %v174, %v183
    %v185 = vadd.f32 %v182, %v184
    %v186 = vstv %s117
    %v187 = vadd.f32 %v185, %v186
    %s188 = scalar_lea.vmem [#allocation12], %s122
    %189 = vst [vmem:[%s188] sm:$0xff] %v187
    %v190 = vstv %s98
    %v191 = vmul.f32 %v141, %v190
    %v192 = vstv %s103
    %v193 = vmul.f32 %v152, %v192
    %v194 = vadd.f32 %v191, %v193
    %v195 = vstv %s108
    %v196 = vmul.f32 %v163, %v195
    %v197 = vadd.f32 %v194, %v196
    %v198 = vstv %s113
    %v199 = vmul.f32 %v174, %v198
    %v200 = vadd.f32 %v197, %v199
    %v201 = vstv %s118
    %v202 = vadd.f32 %v200, %v201
    %s203 = scalar_lea.vmem [#allocation12], %s125
    %204 = vst [vmem:[%s203] sm:$0xff] %v202
    %v205 = vstv %s99
    %v206 = vmul.f32 %v141, %v205
    %v207 = vstv %s104
    %v208 = vmul.f32 %v152, %v207
    %v209 = vadd.f32 %v206, %v208
    %v210 = vstv %s109
    %v211 = vmul.f32 %v163, %v210
    %v212 = vadd.f32 %v209, %v211
    %v213 = vstv %s114
    %v214 = vmul.f32 %v174, %v213
    %v215 = vadd.f32 %v212, %v214
    %v216 = vstv %s119
    %v217 = vadd.f32 %v215, %v216
    %s218 = scalar_lea.vmem [#allocation12], %s128
    %219 = vst [vmem:[%s218] sm:$0xff] %v217
    %v220 = vstv %s100
    %v221 = vmul.f32 %v141, %v220
    %v222 = vstv %s105
    %v223 = vmul.f32 %v152, %v222
    %v224 = vadd.f32 %v221, %v223
    %v225 = vstv %s110
    %v226 = vmul.f32 %v163, %v225
    %v227 = vadd.f32 %v224, %v226
    %v228 = vstv %s115
    %v229 = vmul.f32 %v174, %v228
    %v230 = vadd.f32 %v227, %v229
    %v231 = vstv %s120
    %v232 = vadd.f32 %v230, %v231
    %s233 = sadd.s32 %s122, 24
    %s234 = scalar_lea.vmem [#allocation12], %s233
    %235 = vst [vmem:[%s234] sm:$0xff] %v232
    %v236 = vstv %s101
    %v237 = vmul.f32 %v141, %v236
    %v238 = vstv %s106
    %v239 = vmul.f32 %v152, %v238
    %v240 = vadd.f32 %v237, %v239
    %v241 = vstv %s111
    %v242 = vmul.f32 %v163, %v241
    %v243 = vadd.f32 %v240, %v242
    %v244 = vstv %s116
    %v245 = vmul.f32 %v174, %v244
    %v246 = vadd.f32 %v243, %v245
    %v247 = vstv %s121
    %v248 = vadd.f32 %v246, %v247
    %s249 = sadd.s32 %s122, 32
    %s250 = scalar_lea.vmem [#allocation12], %s249
    %251 = vst [vmem:[%s250] sm:$0xff] %v248
    // Predicated region
    $region42: #{tpu_custom_call.1} parent=1 // pred_check
      _
    $region43: #{tpu_custom_call.1} parent=1 // pred_check_branch
      %253 = sbr.rel (0) target = $region45
    $region44: #{tpu_custom_call.1} parent=1 // pred_region
      %s255 = ssub.s32 640, 640
      %256 = vsyncadd [#allocation4], %s255
      %s257 = sshll.u32 [#allocation12], 4
      %s258 = int_to_ptr.vmem [resolvable:$true] %s257
      %263 = dma.vmem_to_hbm [thread:$0]  %s258, 640, %s5, [#allocation4], 128, 128, 8
    $region45: #{tpu_custom_call.1} parent=1 // pred_fallthru
      _
    // Predicated region
    $region46: #{tpu_custom_call.1} parent=1 // pred_check
      _
    $region47: #{tpu_custom_call.1} parent=1 // pred_check_branch
      %265 = sbr.rel (0) target = $region49
    $region48: #{tpu_custom_call.1} parent=1 // pred_region
      %266 = dma.done [#allocation4], 640
    $region49: #{tpu_custom_call.1} parent=1 // pred_fallthru
      _
    %267 = vsyncpa [#allocation3], 1
    %268 = vsyncpa [#allocation4], 1
    %269 = vsyncpa [#allocation5], 1
    %270 = vsyncpa [#allocation6], 1
    %271 = vsyncpa [#allocation9], 1

</llo_original>
